<compile_context>
chip_gen: v6e
topology: v6e:2x2x1
jax: 0.10.0
libtpu: 0.0.40
codegen_flags: <defaults>
</compile_context>

<pallas_src>
import functools

import jax
import jax.numpy as jnp
from jax.experimental import pallas as pl
from jax.experimental.pallas import tpu as pltpu

LANE = 128        # TPU lane width (last dim)
SUBLANE = 8       # f32 sublane tile
TILE_ROWS = 512   # rows per grid step; block = TILE_ROWS x 128
NUM_CORES = 2     # leading "parallel" grid axis (both TCs on v7x)


def _fused_kernel(p_ref, t_ref, m_ref,
                  c0_ref, c1_ref, ms_ref, s0_ref, s1_ref,
                  *, rows, tile_rows, blocks_per_core):
    step = pl.program_id(1)

    @pl.when(step == 0)
    def _():
        c0_ref[...] = jnp.zeros_like(c0_ref)
        c1_ref[...] = jnp.zeros_like(c1_ref)
        ms_ref[...] = jnp.zeros_like(ms_ref)
        s0_ref[...] = jnp.zeros_like(s0_ref)
        s1_ref[...] = jnp.zeros_like(s1_ref)

    x = p_ref[...].astype(jnp.float32)
    t = t_ref[...].astype(jnp.float32)
    m = m_ref[...].astype(jnp.float32)

    # Mask rows past the end of the (row-padded) arrays: the ragged last block and
    # the phantom blocks created by the 2-core split read unspecified data.
    block_idx = pl.program_id(0) * blocks_per_core + step
    row0 = block_idx * tile_rows
    row_ids = row0 + jax.lax.broadcasted_iota(jnp.int32, (tile_rows, LANE), 0)
    in_bounds = row_ids < rows

    valid = (m != 0.0) & in_bounds
    cls1 = valid & (t >= 0.5)
    cls0 = valid & (t < 0.5)

    # Numerically stable BCEWithLogitsLoss(reduction='none'):
    #   max(x, 0) - x*t + log1p(exp(-|x|))
    bce = jnp.maximum(x, 0.0) - x * t + jnp.log1p(jnp.exp(-jnp.abs(x)))

    zero = jnp.zeros_like(x)

    def fold(v):
        # (tile_rows, LANE) -> (SUBLANE, LANE) partial sum; keeps the per-block
        # reduce on the VPU (no cross-sublane XLU work in the steady state).
        return jnp.sum(v.reshape(tile_rows // SUBLANE, SUBLANE, LANE), axis=0)

    c0_ref[...] += fold(cls0.astype(jnp.float32))
    c1_ref[...] += fold(cls1.astype(jnp.float32))
    ms_ref[...] += fold(jnp.where(in_bounds, m, zero))
    s0_ref[...] += fold(jnp.where(cls0, bce, zero))
    s1_ref[...] += fold(jnp.where(cls1, bce, zero))


def bce_loss(pred, target, mask_valid, *, tile_rows=TILE_ROWS, num_cores=NUM_CORES):
    assert pred.shape == target.shape == mask_valid.shape
    total = pred.size

    p1 = pred.reshape(-1)
    t1 = target.reshape(-1)
    m1 = mask_valid.reshape(-1)

    # Pad only when needed, and only up to a multiple of SUBLANE*LANE so the flat
    # arrays reshape into whole (8, 128) tiles. Padded mask == 0 -> no contribution.
    pad = (-total) % (SUBLANE * LANE)
    if pad:
        p1 = jnp.pad(p1, (0, pad))
        t1 = jnp.pad(t1, (0, pad))
        m1 = jnp.pad(m1, (0, pad))

    rows = (total + pad) // LANE                     # multiple of SUBLANE
    tile_rows = min(tile_rows, rows)                 # both multiples of SUBLANE
    num_blocks = -(-rows // tile_rows)
    blocks_per_core = -(-num_blocks // num_cores)

    p2 = p1.reshape(rows, LANE)
    t2 = t1.reshape(rows, LANE)
    m2 = m1.reshape(rows, LANE)

    kernel = functools.partial(
        _fused_kernel, rows=rows, tile_rows=tile_rows,
        blocks_per_core=blocks_per_core)

    def in_index(c, i):
        # Clamp phantom blocks (core-imbalance / ragged grid) onto the last real
        # block; their rows are zeroed in-kernel by the row-id bound check.
        return (jnp.minimum(c * blocks_per_core + i, num_blocks - 1), 0)

    tile_spec = pl.BlockSpec((tile_rows, LANE), in_index)
    acc_spec = pl.BlockSpec((None, SUBLANE, LANE), lambda c, i: (c, 0, 0))
    acc_shape = jax.ShapeDtypeStruct((num_cores, SUBLANE, LANE), jnp.float32)

    c0_p, c1_p, ms_p, s0_p, s1_p = pl.pallas_call(
        kernel,
        out_shape=(acc_shape,) * 5,
        grid_spec=pltpu.PrefetchScalarGridSpec(
            num_scalar_prefetch=0,
            grid=(num_cores, blocks_per_core),
            in_specs=[tile_spec, tile_spec, tile_spec],
            out_specs=[acc_spec] * 5,
        ),
        compiler_params=pltpu.CompilerParams(
            dimension_semantics=("parallel", "arbitrary"),
            vmem_limit_bytes=32 * 1024 * 1024,
        ),
    )(p2, t2, m2)

    count0 = jnp.sum(c0_p)
    count1 = jnp.sum(c1_p)
    mask_sum = jnp.sum(ms_p)
    s0 = jnp.sum(s0_p)
    s1 = jnp.sum(s1_p)

    # 2-element weight math (mirrors the torch scalar ops).
    weights = jnp.stack([count0, count1])
    weights = jnp.where(jnp.isinf(weights), 1.0, weights)
    weights = (weights / jnp.sum(weights)) ** (-0.5)
    weights = jnp.log(weights + 1.1)

    # Separable weighted sum: sum(bce * w) = w0*S0 + w1*S1. Guard the empty-class
    # case (infinite weight but zero contributing pixels, exactly as in torch where
    # those pixels' weights are zeroed by the mask).
    term0 = jnp.where(count0 > 0, weights[0] * s0, 0.0)
    term1 = jnp.where(count1 > 0, weights[1] * s1, 0.0)
    return (term0 + term1) / mask_sum


def bce_loss_ref(pred, target, mask_valid):
    """Pure-JAX reference mirroring the PyTorch module (per-pixel weights)."""
    x = pred.astype(jnp.float32)
    t = target.astype(jnp.float32)
    m = mask_valid.astype(jnp.float32)
    valid = m != 0.0
    count1 = jnp.sum(jnp.where(valid & (t >= 0.5), 1.0, 0.0))
    count0 = jnp.sum(jnp.where(valid & (t < 0.5), 1.0, 0.0))
    weights = jnp.stack([count0, count1])
    weights = jnp.where(jnp.isinf(weights), 1.0, weights)
    weights = (weights / jnp.sum(weights)) ** (-0.5)
    weights = jnp.log(weights + 1.1)
    w = jnp.where(t >= 0.5, weights[1], weights[0])
    w = jnp.where(valid, w, 0.0)
    bce = jnp.maximum(x, 0.0) - x * t + jnp.log1p(jnp.exp(-jnp.abs(x)))
    return jnp.sum(bce * w) / jnp.sum(m)


if __name__ == "__main__":
    key = jax.random.PRNGKey(0)

    # --- primary small test: (N, H, W) = (2, 16, 16), f32 inputs ---------------
    k1, k2, k3, k4, k5, k6 = jax.random.split(key, 6)
    N, H, W = 2, 16, 16
    pred = jax.random.normal(k1, (N, H, W), dtype=jnp.float32)
    target = jax.random.bernoulli(k2, 0.5, (N, H, W)).astype(jnp.float32)
    mask_valid = jax.random.bernoulli(k3, 0.7, (N, H, W)).astype(jnp.float32)

    loss = jax.block_until_ready(bce_loss(pred, target, mask_valid))
    ref = jax.block_until_ready(bce_loss_ref(pred, target, mask_valid))
    assert loss.shape == (), f"expected scalar, got {loss.shape}"
    assert jnp.allclose(loss, ref, rtol=2e-5, atol=1e-6), (loss, ref)

    # --- secondary test: ragged size, multi-block grid, bf16 pred --------------
    N2, H2, W2 = 2, 200, 167  # 66800 elements -> pad, 2 blocks, partial last block
    pred2 = jax.random.normal(k4, (N2, H2, W2), dtype=jnp.bfloat16)
    target2 = jax.random.bernoulli(k5, 0.3, (N2, H2, W2)).astype(jnp.float32)
    mask2 = jax.random.bernoulli(k6, 0.8, (N2, H2, W2)).astype(jnp.float32)

    loss2 = jax.block_until_ready(bce_loss(pred2, target2, mask2))
    ref2 = jax.block_until_ready(bce_loss_ref(pred2, target2, mask2))
    assert jnp.allclose(loss2, ref2, rtol=2e-5, atol=1e-6), (loss2, ref2)

    print("KERNEL_OK")
</pallas_src>

<mosaic_0001>
module attributes {stable_mosaic.version = 11 : i64} {
  func.func @_fused_kernel(%arg0: i32, %arg1: i32, %arg2: memref<8x128xf32, #tpu.memory_space<vmem>>, %arg3: memref<8x128xf32, #tpu.memory_space<vmem>>, %arg4: memref<8x128xf32, #tpu.memory_space<vmem>>, %arg5: memref<1x8x128xf32, #tpu.memory_space<vmem>>, %arg6: memref<1x8x128xf32, #tpu.memory_space<vmem>>, %arg7: memref<1x8x128xf32, #tpu.memory_space<vmem>>, %arg8: memref<1x8x128xf32, #tpu.memory_space<vmem>>, %arg9: memref<1x8x128xf32, #tpu.memory_space<vmem>>) attributes {dimension_semantics = [#tpu.dimension_semantics<parallel>, #tpu.dimension_semantics<arbitrary>], iteration_bounds = array<i64: 2, 1>, scalar_prefetch = 0 : i64, scratch_operands = 0 : i64, tpu.core_type = #tpu.core_type<tc>, window_params = [{transform_indices = @transform_0, window_bounds = array<i64: 8, 128>}, {transform_indices = @transform_1, window_bounds = array<i64: 8, 128>}, {transform_indices = @transform_2, window_bounds = array<i64: 8, 128>}, {transform_indices = @transform_3, window_bounds = array<i64: 1, 8, 128>}, {transform_indices = @transform_4, window_bounds = array<i64: 1, 8, 128>}, {transform_indices = @transform_5, window_bounds = array<i64: 1, 8, 128>}, {transform_indices = @transform_6, window_bounds = array<i64: 1, 8, 128>}, {transform_indices = @transform_7, window_bounds = array<i64: 1, 8, 128>}]} {
    %c0_i32 = arith.constant 0 : i32
    %0 = arith.cmpi eq, %arg1, %c0_i32 : i32
    %1 = arith.extui %0 : i1 to i32
    %c0_i32_0 = arith.constant 0 : i32
    %2 = arith.cmpi ne, %1, %c0_i32_0 : i32
    scf.if %2 {
      %cst_47 = arith.constant 0.000000e+00 : f32
      %81 = vector.broadcast %cst_47 : f32 to vector<8x128xf32>
      %c0_48 = arith.constant 0 : index
      %c0_49 = arith.constant 0 : index
      %c0_50 = arith.constant 0 : index
      %82 = vector.load %arg5[%c0_48, %c0_49, %c0_50] : memref<1x8x128xf32, #tpu.memory_space<vmem>>, vector<1x8x128xf32>
      %83 = vector.shape_cast %82 : vector<1x8x128xf32> to vector<8x128xf32>
      %84 = vector.shape_cast %81 : vector<8x128xf32> to vector<1x8x128xf32>
      tpu.vector_store %arg5[%c0_48, %c0_49, %c0_50], %84 {strides = array<i32>} : memref<1x8x128xf32, #tpu.memory_space<vmem>>, vector<1x8x128xf32>,
      %cst_51 = arith.constant 0.000000e+00 : f32
      %85 = vector.broadcast %cst_51 : f32 to vector<8x128xf32>
      %c0_52 = arith.constant 0 : index
      %c0_53 = arith.constant 0 : index
      %c0_54 = arith.constant 0 : index
      %86 = vector.load %arg6[%c0_52, %c0_53, %c0_54] : memref<1x8x128xf32, #tpu.memory_space<vmem>>, vector<1x8x128xf32>
      %87 = vector.shape_cast %86 : vector<1x8x128xf32> to vector<8x128xf32>
      %88 = vector.shape_cast %85 : vector<8x128xf32> to vector<1x8x128xf32>
      tpu.vector_store %arg6[%c0_52, %c0_53, %c0_54], %88 {strides = array<i32>} : memref<1x8x128xf32, #tpu.memory_space<vmem>>, vector<1x8x128xf32>,
      %cst_55 = arith.constant 0.000000e+00 : f32
      %89 = vector.broadcast %cst_55 : f32 to vector<8x128xf32>
      %c0_56 = arith.constant 0 : index
      %c0_57 = arith.constant 0 : index
      %c0_58 = arith.constant 0 : index
      %90 = vector.load %arg7[%c0_56, %c0_57, %c0_58] : memref<1x8x128xf32, #tpu.memory_space<vmem>>, vector<1x8x128xf32>
      %91 = vector.shape_cast %90 : vector<1x8x128xf32> to vector<8x128xf32>
      %92 = vector.shape_cast %89 : vector<8x128xf32> to vector<1x8x128xf32>
      tpu.vector_store %arg7[%c0_56, %c0_57, %c0_58], %92 {strides = array<i32>} : memref<1x8x128xf32, #tpu.memory_space<vmem>>, vector<1x8x128xf32>,
      %cst_59 = arith.constant 0.000000e+00 : f32
      %93 = vector.broadcast %cst_59 : f32 to vector<8x128xf32>
      %c0_60 = arith.constant 0 : index
      %c0_61 = arith.constant 0 : index
      %c0_62 = arith.constant 0 : index
      %94 = vector.load %arg8[%c0_60, %c0_61, %c0_62] : memref<1x8x128xf32, #tpu.memory_space<vmem>>, vector<1x8x128xf32>
      %95 = vector.shape_cast %94 : vector<1x8x128xf32> to vector<8x128xf32>
      %96 = vector.shape_cast %93 : vector<8x128xf32> to vector<1x8x128xf32>
      tpu.vector_store %arg8[%c0_60, %c0_61, %c0_62], %96 {strides = array<i32>} : memref<1x8x128xf32, #tpu.memory_space<vmem>>, vector<1x8x128xf32>,
      %cst_63 = arith.constant 0.000000e+00 : f32
      %97 = vector.broadcast %cst_63 : f32 to vector<8x128xf32>
      %c0_64 = arith.constant 0 : index
      %c0_65 = arith.constant 0 : index
      %c0_66 = arith.constant 0 : index
      %98 = vector.load %arg9[%c0_64, %c0_65, %c0_66] : memref<1x8x128xf32, #tpu.memory_space<vmem>>, vector<1x8x128xf32>
      %99 = vector.shape_cast %98 : vector<1x8x128xf32> to vector<8x128xf32>
      %100 = vector.shape_cast %97 : vector<8x128xf32> to vector<1x8x128xf32>
      tpu.vector_store %arg9[%c0_64, %c0_65, %c0_66], %100 {strides = array<i32>} : memref<1x8x128xf32, #tpu.memory_space<vmem>>, vector<1x8x128xf32>,
    } else {
    }
    %c0 = arith.constant 0 : index
    %c0_1 = arith.constant 0 : index
    %3 = vector.load %arg2[%c0, %c0_1] : memref<8x128xf32, #tpu.memory_space<vmem>>, vector<8x128xf32>
    %c0_2 = arith.constant 0 : index
    %c0_3 = arith.constant 0 : index
    %4 = vector.load %arg3[%c0_2, %c0_3] : memref<8x128xf32, #tpu.memory_space<vmem>>, vector<8x128xf32>
    %c0_4 = arith.constant 0 : index
    %c0_5 = arith.constant 0 : index
    %5 = vector.load %arg4[%c0_4, %c0_5] : memref<8x128xf32, #tpu.memory_space<vmem>>, vector<8x128xf32>
    %c1_i32 = arith.constant 1 : i32
    %6 = arith.muli %arg0, %c1_i32 : i32
    %7 = arith.addi %6, %arg1 : i32
    %c8_i32 = arith.constant 8 : i32
    %8 = arith.muli %7, %c8_i32 : i32
    %9 = tpu.iota {dimensions = array<i32: 0>} : vector<8x128xi32>
    %10 = vector.broadcast %8 : i32 to vector<8x128xi32>
    %11 = arith.addi %10, %9 : vector<8x128xi32>
    %c8_i32_6 = arith.constant 8 : i32
    %12 = vector.broadcast %c8_i32_6 : i32 to vector<8x128xi32>
    %13 = arith.cmpi slt, %11, %12 : vector<8x128xi32>
    %cst = arith.constant 0.000000e+00 : f32
    %14 = vector.broadcast %cst : f32 to vector<8x128xf32>
    %15 = arith.cmpf one, %5, %14 : vector<8x128xf32>
    %16 = arith.andi %15, %13 : vector<8x128xi1>
    %cst_7 = arith.constant 5.000000e-01 : f32
    %17 = vector.broadcast %cst_7 : f32 to vector<8x128xf32>
    %18 = arith.cmpf oge, %4, %17 : vector<8x128xf32>
    %19 = arith.andi %16, %18 : vector<8x128xi1>
    %cst_8 = arith.constant 5.000000e-01 : f32
    %20 = vector.broadcast %cst_8 : f32 to vector<8x128xf32>
    %21 = arith.cmpf olt, %4, %20 : vector<8x128xf32>
    %22 = arith.andi %16, %21 : vector<8x128xi1>
    %cst_9 = arith.constant 0.000000e+00 : f32
    %23 = vector.broadcast %cst_9 : f32 to vector<8x128xf32>
    %24 = arith.maximumf %3, %23 : vector<8x128xf32>
    %25 = arith.mulf %3, %4 : vector<8x128xf32>
    %26 = arith.subf %24, %25 : vector<8x128xf32>
    %27 = math.absf %3 : vector<8x128xf32>
    %cst_10 = arith.constant 0.000000e+00 : f32
    %28 = vector.broadcast %cst_10 : f32 to vector<8x128xf32>
    %29 = arith.subf %28, %27 : vector<8x128xf32>
    %30 = math.exp %29 : vector<8x128xf32>
    %31 = math.log1p %30 : vector<8x128xf32>
    %32 = arith.addf %26, %31 : vector<8x128xf32>
    %cst_11 = arith.constant 0.000000e+00 : f32
    %33 = vector.broadcast %cst_11 : f32 to vector<8x128xf32>
    %c0_12 = arith.constant 0 : index
    %c0_13 = arith.constant 0 : index
    %c0_14 = arith.constant 0 : index
    %34 = vector.load %arg5[%c0_12, %c0_13, %c0_14] : memref<1x8x128xf32, #tpu.memory_space<vmem>>, vector<1x8x128xf32>
    %35 = vector.shape_cast %34 : vector<1x8x128xf32> to vector<8x128xf32>
    %36 = arith.extui %22 : vector<8x128xi1> to vector<8x128xi32>
    %37 = arith.sitofp %36 : vector<8x128xi32> to vector<8x128xf32>
    %38 = vector.shape_cast %37 : vector<8x128xf32> to vector<1x8x128xf32>
    %cst_15 = arith.constant dense<0.000000e+00> : vector<8x128xf32>
    %39 = vector.multi_reduction <add>, %38, %cst_15 [0] : vector<1x8x128xf32> to vector<8x128xf32>
    %40 = arith.addf %35, %39 : vector<8x128xf32>
    %c0_16 = arith.constant 0 : index
    %c0_17 = arith.constant 0 : index
    %c0_18 = arith.constant 0 : index
    %41 = vector.load %arg5[%c0_16, %c0_17, %c0_18] : memref<1x8x128xf32, #tpu.memory_space<vmem>>, vector<1x8x128xf32>
    %42 = vector.shape_cast %41 : vector<1x8x128xf32> to vector<8x128xf32>
    %43 = vector.shape_cast %40 : vector<8x128xf32> to vector<1x8x128xf32>
    tpu.vector_store %arg5[%c0_16, %c0_17, %c0_18], %43 {strides = array<i32>} : memref<1x8x128xf32, #tpu.memory_space<vmem>>, vector<1x8x128xf32>,
    %c0_19 = arith.constant 0 : index
    %c0_20 = arith.constant 0 : index
    %c0_21 = arith.constant 0 : index
    %44 = vector.load %arg6[%c0_19, %c0_20, %c0_21] : memref<1x8x128xf32, #tpu.memory_space<vmem>>, vector<1x8x128xf32>
    %45 = vector.shape_cast %44 : vector<1x8x128xf32> to vector<8x128xf32>
    %46 = arith.extui %19 : vector<8x128xi1> to vector<8x128xi32>
    %47 = arith.sitofp %46 : vector<8x128xi32> to vector<8x128xf32>
    %48 = vector.shape_cast %47 : vector<8x128xf32> to vector<1x8x128xf32>
    %cst_22 = arith.constant dense<0.000000e+00> : vector<8x128xf32>
    %49 = vector.multi_reduction <add>, %48, %cst_22 [0] : vector<1x8x128xf32> to vector<8x128xf32>
    %50 = arith.addf %45, %49 : vector<8x128xf32>
    %c0_23 = arith.constant 0 : index
    %c0_24 = arith.constant 0 : index
    %c0_25 = arith.constant 0 : index
    %51 = vector.load %arg6[%c0_23, %c0_24, %c0_25] : memref<1x8x128xf32, #tpu.memory_space<vmem>>, vector<1x8x128xf32>
    %52 = vector.shape_cast %51 : vector<1x8x128xf32> to vector<8x128xf32>
    %53 = vector.shape_cast %50 : vector<8x128xf32> to vector<1x8x128xf32>
    tpu.vector_store %arg6[%c0_23, %c0_24, %c0_25], %53 {strides = array<i32>} : memref<1x8x128xf32, #tpu.memory_space<vmem>>, vector<1x8x128xf32>,
    %c0_26 = arith.constant 0 : index
    %c0_27 = arith.constant 0 : index
    %c0_28 = arith.constant 0 : index
    %54 = vector.load %arg7[%c0_26, %c0_27, %c0_28] : memref<1x8x128xf32, #tpu.memory_space<vmem>>, vector<1x8x128xf32>
    %55 = vector.shape_cast %54 : vector<1x8x128xf32> to vector<8x128xf32>
    %56 = arith.select %13, %5, %33 : vector<8x128xi1>, vector<8x128xf32>
    %57 = vector.shape_cast %56 : vector<8x128xf32> to vector<1x8x128xf32>
    %cst_29 = arith.constant dense<0.000000e+00> : vector<8x128xf32>
    %58 = vector.multi_reduction <add>, %57, %cst_29 [0] : vector<1x8x128xf32> to vector<8x128xf32>
    %59 = arith.addf %55, %58 : vector<8x128xf32>
    %c0_30 = arith.constant 0 : index
    %c0_31 = arith.constant 0 : index
    %c0_32 = arith.constant 0 : index
    %60 = vector.load %arg7[%c0_30, %c0_31, %c0_32] : memref<1x8x128xf32, #tpu.memory_space<vmem>>, vector<1x8x128xf32>
    %61 = vector.shape_cast %60 : vector<1x8x128xf32> to vector<8x128xf32>
    %62 = vector.shape_cast %59 : vector<8x128xf32> to vector<1x8x128xf32>
    tpu.vector_store %arg7[%c0_30, %c0_31, %c0_32], %62 {strides = array<i32>} : memref<1x8x128xf32, #tpu.memory_space<vmem>>, vector<1x8x128xf32>,
    %c0_33 = arith.constant 0 : index
    %c0_34 = arith.constant 0 : index
    %c0_35 = arith.constant 0 : index
    %63 = vector.load %arg8[%c0_33, %c0_34, %c0_35] : memref<1x8x128xf32, #tpu.memory_space<vmem>>, vector<1x8x128xf32>
    %64 = vector.shape_cast %63 : vector<1x8x128xf32> to vector<8x128xf32>
    %65 = arith.select %22, %32, %33 : vector<8x128xi1>, vector<8x128xf32>
    %66 = vector.shape_cast %65 : vector<8x128xf32> to vector<1x8x128xf32>
    %cst_36 = arith.constant dense<0.000000e+00> : vector<8x128xf32>
    %67 = vector.multi_reduction <add>, %66, %cst_36 [0] : vector<1x8x128xf32> to vector<8x128xf32>
    %68 = arith.addf %64, %67 : vector<8x128xf32>
    %c0_37 = arith.constant 0 : index
    %c0_38 = arith.constant 0 : index
    %c0_39 = arith.constant 0 : index
    %69 = vector.load %arg8[%c0_37, %c0_38, %c0_39] : memref<1x8x128xf32, #tpu.memory_space<vmem>>, vector<1x8x128xf32>
    %70 = vector.shape_cast %69 : vector<1x8x128xf32> to vector<8x128xf32>
    %71 = vector.shape_cast %68 : vector<8x128xf32> to vector<1x8x128xf32>
    tpu.vector_store %arg8[%c0_37, %c0_38, %c0_39], %71 {strides = array<i32>} : memref<1x8x128xf32, #tpu.memory_space<vmem>>, vector<1x8x128xf32>,
    %c0_40 = arith.constant 0 : index
    %c0_41 = arith.constant 0 : index
    %c0_42 = arith.constant 0 : index
    %72 = vector.load %arg9[%c0_40, %c0_41, %c0_42] : memref<1x8x128xf32, #tpu.memory_space<vmem>>, vector<1x8x128xf32>
    %73 = vector.shape_cast %72 : vector<1x8x128xf32> to vector<8x128xf32>
    %74 = arith.select %19, %32, %33 : vector<8x128xi1>, vector<8x128xf32>
    %75 = vector.shape_cast %74 : vector<8x128xf32> to vector<1x8x128xf32>
    %cst_43 = arith.constant dense<0.000000e+00> : vector<8x128xf32>
    %76 = vector.multi_reduction <add>, %75, %cst_43 [0] : vector<1x8x128xf32> to vector<8x128xf32>
    %77 = arith.addf %73, %76 : vector<8x128xf32>
    %c0_44 = arith.constant 0 : index
    %c0_45 = arith.constant 0 : index
    %c0_46 = arith.constant 0 : index
    %78 = vector.load %arg9[%c0_44, %c0_45, %c0_46] : memref<1x8x128xf32, #tpu.memory_space<vmem>>, vector<1x8x128xf32>
    %79 = vector.shape_cast %78 : vector<1x8x128xf32> to vector<8x128xf32>
    %80 = vector.shape_cast %77 : vector<8x128xf32> to vector<1x8x128xf32>
    tpu.vector_store %arg9[%c0_44, %c0_45, %c0_46], %80 {strides = array<i32>} : memref<1x8x128xf32, #tpu.memory_space<vmem>>, vector<1x8x128xf32>,
    return
  }
  func.func @transform_0(%arg0: i32, %arg1: i32) -> (i32, i32) {
    %c1_i32 = arith.constant 1 : i32
    %0 = arith.muli %arg0, %c1_i32 : i32
    %1 = arith.addi %0, %arg1 : i32
    %c0_i32 = arith.constant 0 : i32
    %2 = arith.minsi %1, %c0_i32 : i32
    %c0_i32_0 = arith.constant 0 : i32
    %c0_i32_1 = arith.constant 0 : i32
    return %2, %c0_i32_0 : i32, i32
  }
  func.func @transform_1(%arg0: i32, %arg1: i32) -> (i32, i32) {
    %c1_i32 = arith.constant 1 : i32
    %0 = arith.muli %arg0, %c1_i32 : i32
    %1 = arith.addi %0, %arg1 : i32
    %c0_i32 = arith.constant 0 : i32
    %2 = arith.minsi %1, %c0_i32 : i32
    %c0_i32_0 = arith.constant 0 : i32
    %c0_i32_1 = arith.constant 0 : i32
    return %2, %c0_i32_0 : i32, i32
  }
  func.func @transform_2(%arg0: i32, %arg1: i32) -> (i32, i32) {
    %c1_i32 = arith.constant 1 : i32
    %0 = arith.muli %arg0, %c1_i32 : i32
    %1 = arith.addi %0, %arg1 : i32
    %c0_i32 = arith.constant 0 : i32
    %2 = arith.minsi %1, %c0_i32 : i32
    %c0_i32_0 = arith.constant 0 : i32
    %c0_i32_1 = arith.constant 0 : i32
    return %2, %c0_i32_0 : i32, i32
  }
  func.func @transform_3(%arg0: i32, %arg1: i32) -> (i32, i32, i32) {
    %c0_i32 = arith.constant 0 : i32
    %c0_i32_0 = arith.constant 0 : i32
    %c0_i32_1 = arith.constant 0 : i32
    return %arg0, %c0_i32, %c0_i32_0 : i32, i32, i32
  }
  func.func @transform_4(%arg0: i32, %arg1: i32) -> (i32, i32, i32) {
    %c0_i32 = arith.constant 0 : i32
    %c0_i32_0 = arith.constant 0 : i32
    %c0_i32_1 = arith.constant 0 : i32
    return %arg0, %c0_i32, %c0_i32_0 : i32, i32, i32
  }
  func.func @transform_5(%arg0: i32, %arg1: i32) -> (i32, i32, i32) {
    %c0_i32 = arith.constant 0 : i32
    %c0_i32_0 = arith.constant 0 : i32
    %c0_i32_1 = arith.constant 0 : i32
    return %arg0, %c0_i32, %c0_i32_0 : i32, i32, i32
  }
  func.func @transform_6(%arg0: i32, %arg1: i32) -> (i32, i32, i32) {
    %c0_i32 = arith.constant 0 : i32
    %c0_i32_0 = arith.constant 0 : i32
    %c0_i32_1 = arith.constant 0 : i32
    return %arg0, %c0_i32, %c0_i32_0 : i32, i32, i32
  }
  func.func @transform_7(%arg0: i32, %arg1: i32) -> (i32, i32, i32) {
    %c0_i32 = arith.constant 0 : i32
    %c0_i32_0 = arith.constant 0 : i32
    %c0_i32_1 = arith.constant 0 : i32
    return %arg0, %c0_i32, %c0_i32_0 : i32, i32, i32
  }
}

</mosaic_0001>

<llo_original>
// kernel: tpu_custom_call.1
$region0: #{tpu_custom_call.1}
  #allocation0 [shape = 'u32[]', space=smem, size = 0x4, offset = 0x4, fixed_abs, tag = 'smem constant byte address 0x4 - core index']
  #allocation1 [shape = 'u32[144,128]{1,0:T(1,128)}', space=vmem, size = 0x12000, scoped, tag = 'internal scratch']
  %s0 = inlined_call_operand.hbm [shape: f32[8,128], index: 0, kind: input, shape index: {}]
  %s1 = inlined_call_operand.hbm [shape: f32[8,128], index: 1, kind: input, shape index: {}]
  %s2 = inlined_call_operand.hbm [shape: f32[8,128], index: 2, kind: input, shape index: {}]
  %s3 = inlined_call_operand.hbm [shape: f32[2,8,128], index: 3, kind: output, shape index: {0}]
  %s4 = inlined_call_operand.hbm [shape: f32[2,8,128], index: 4, kind: output, shape index: {1}]
  %s5 = inlined_call_operand.hbm [shape: f32[2,8,128], index: 5, kind: output, shape index: {2}]
  %s6 = inlined_call_operand.hbm [shape: f32[2,8,128], index: 6, kind: output, shape index: {3}]
  %s7 = inlined_call_operand.hbm [shape: f32[2,8,128], index: 7, kind: output, shape index: {4}]
  %8 = xla_tuple %s3, %s4, %s5, %s6, %s7
  %s9 = sld [smem:[#allocation0]]
  $region93: #{tpu_custom_call.1} parent=0
    _
  %s11 = ssub.s32 1, %s9
  %s12 = scalar_select 0, %s11, %s9
  $region1: #{tpu_custom_call.1} parent=0
    #allocation2 [shape = 'u8[8192]{0}', space=vmem, size = 0x2000, scoped, tag = 'input window, operand 0']
    #allocation3 [shape = 's32[2]{0}', space=sflag, size = 0x8, scoped, tag = 'scoped memory for tpu_custom_call.1']
    #allocation4 [shape = 's32[2]{0}', space=sflag, size = 0x8, scoped, tag = 'scoped memory for tpu_custom_call.1']
    #allocation5 [shape = 'u8[8192]{0}', space=vmem, size = 0x2000, scoped, tag = 'input window, operand 1']
    #allocation6 [shape = 's32[2]{0}', space=sflag, size = 0x8, scoped, tag = 'scoped memory for tpu_custom_call.1']
    #allocation7 [shape = 'u8[8192]{0}', space=vmem, size = 0x2000, scoped, tag = 'input window, operand 2']
    #allocation8 [shape = 'u8[8192]{0}', space=vmem, size = 0x2000, scoped, tag = 'output window, operand 0']
    #allocation9 [shape = 'u8[8192]{0}', space=vmem, size = 0x2000, scoped, tag = 'output window, operand 1']
    #allocation10 [shape = 's32[2]{0}', space=sflag, size = 0x8, scoped, tag = 'scoped memory for tpu_custom_call.1']
    #allocation11 [shape = 'u8[8192]{0}', space=vmem, size = 0x2000, scoped, tag = 'output window, operand 2']
    #allocation12 [shape = 'u8[8192]{0}', space=vmem, size = 0x2000, scoped, tag = 'output window, operand 3']
    #allocation13 [shape = 's32[2]{0}', space=sflag, size = 0x8, scoped, tag = 'scoped memory for tpu_custom_call.1']
    #allocation14 [shape = 'u8[8192]{0}', space=vmem, size = 0x2000, scoped, tag = 'output window, operand 4']
    %13 = vsyncpa [#allocation3], 0
    %s14 = scalar_lea.sflag [#allocation3], 1
    %15 = vsyncpa %s14, 0
    %16 = vsyncpa [#allocation6], 0
    %s17 = scalar_lea.sflag [#allocation6], 1
    %18 = vsyncpa %s17, 0
    %19 = vsyncpa [#allocation4], 0
    %s20 = scalar_lea.sflag [#allocation4], 1
    %21 = vsyncpa %s20, 0
    %22 = vsyncpa [#allocation10], 0
    %s23 = scalar_lea.sflag [#allocation10], 1
    %24 = vsyncpa %s23, 0
    %25 = vsyncpa [#allocation13], 0
    %s26 = scalar_lea.sflag [#allocation13], 1
    %27 = vsyncpa %s26, 0
    loop: start=0, step=1, limit=4
    $region2: #{tpu_custom_call.1} parent=1 // loop_pre_header
      _
    $region3: #{tpu_custom_call.1} parent=1 // loop_header
      %s29 = sphi 0, %s33
      %p30 = scmp.ge.s32.totalorder %s29, 4
      %s36 = sphi 0, %s48
      %s37 = sphi 0, %s44
      %s38 = sphi 0, %s36
      %s39 = sphi 0, %s37
      %s40 = sphi 0, %s38
      %s41 = sphi 0, %s39
      %s57 = sphi 0, %s59
      %s60 = sphi 0, %s57
      %s61 = sphi 0, %s60
      %s77 = sphi 0, %s61
      %s89 = sphi 0, %s91
      %s92 = sphi 0, %s89
      %s93 = sphi 0, %s92
      %s109 = sphi 0, %s93
      %s121 = sphi 0, %s123
      %s124 = sphi 0, %s121
      %s125 = sphi 0, %s124
      %s141 = sphi 0, %s125
      %s147 = sphi 0, %s149
      %s150 = sphi 0, %s147
      %s151 = sphi 0, %s150
      %s167 = sphi 0, %s151
      %s173 = sphi 0, %s175
      %s176 = sphi 0, %s173
      %s177 = sphi 0, %s176
      %s193 = sphi 0, %s177
      %s199 = sphi 0, %s201
      %s202 = sphi 0, %s199
      %s203 = sphi 0, %s202
      %s219 = sphi 0, %s203
      %s225 = sphi 0, %s227
      %s228 = sphi 0, %s225
      %s229 = sphi 0, %s228
      %s245 = sphi 0, %s229
      %s251 = sphi 0, %s253
      %s254 = sphi 0, %s251
      %s255 = sphi 0, %s254
      %s271 = sphi 0, %s255
    $region4: #{tpu_custom_call.1} parent=1 // loop_header_branch
      %32 = sbr.rel (%p30) target = $region8
    $region5: #{tpu_custom_call.1} parent=1 // loop_body
      %s34 = ssub.s32 %s29, 1
      %s35 = ssub.s32 %s29, 2
      %s42 = sadd.s32 1, %s37
      %p43 = scmp.ge.s32.totalorder %s42, 1
      %s44 = scalar_select %p43, 0, %s42
      %s45 = sadd.s32 1, %s36
      %s46 = scalar_select %p43, %s45, %s36
      %p47 = scmp.ge.s32.totalorder %s46, 2
      %s48 = scalar_select %p47, 0, %s46
      %s49 = sadd.s32 %s36, %s37
      %p50 = scmp.lt.s32.totalorder %s49, 0
      %s51 = scalar_select %p50, %s49, 0
      %s52 = sadd.s32 %s48, %s44
      %p53 = scmp.lt.s32.totalorder %s52, 0
      %s54 = scalar_select %p53, %s52, 0
      %s55 = ssub.s32 %s51, %s54
      %p56 = scmp.eq.s32.totalorder %s55, 0
      %s58 = sadd.s32 %s57, 1
      %s59 = scalar_select %p56, %s57, %s58
      %p62 = pneg %p56
      %p63 = scmp.eq.s32.totalorder %s29, 1
      %p64 = por %p62, %p63
      %p65 = scmp.ne.s32.totalorder %s57, %s60
      %p66 = scmp.eq.s32.totalorder %s29, 0
      %p67 = por %p65, %p66
      %p68 = scmp.ne.s32.totalorder %s57, %s60
      %p69 = scmp.eq.s32.totalorder %s34, 1
      %p70 = por %p68, %p69
      %p71 = scmp.ne.s32.totalorder %s60, %s61
      %p72 = scmp.eq.s32.totalorder %s34, 0
      %p73 = por %p71, %p72
      %p74 = scmp.ne.s32.totalorder %s60, %s61
      %p75 = scmp.eq.s32.totalorder %s35, 1
      %p76 = por %p74, %p75
      %p78 = scmp.ne.s32.totalorder %s61, %s77
      %p79 = scmp.eq.s32.totalorder %s35, 0
      %p80 = por %p78, %p79
      %s81 = sadd.s32 %s36, %s37
      %p82 = scmp.lt.s32.totalorder %s81, 0
      %s83 = scalar_select %p82, %s81, 0
      %s84 = sadd.s32 %s48, %s44
      %p85 = scmp.lt.s32.totalorder %s84, 0
      %s86 = scalar_select %p85, %s84, 0
      %s87 = ssub.s32 %s83, %s86
      %p88 = scmp.eq.s32.totalorder %s87, 0
      %s90 = sadd.s32 %s89, 1
      %s91 = scalar_select %p88, %s89, %s90
      %p94 = pneg %p88
      %p95 = scmp.eq.s32.totalorder %s29, 1
      %p96 = por %p94, %p95
      %p97 = scmp.ne.s32.totalorder %s89, %s92
      %p98 = scmp.eq.s32.totalorder %s29, 0
      %p99 = por %p97, %p98
      %p100 = scmp.ne.s32.totalorder %s89, %s92
      %p101 = scmp.eq.s32.totalorder %s34, 1
      %p102 = por %p100, %p101
      %p103 = scmp.ne.s32.totalorder %s92, %s93
      %p104 = scmp.eq.s32.totalorder %s34, 0
      %p105 = por %p103, %p104
      %p106 = scmp.ne.s32.totalorder %s92, %s93
      %p107 = scmp.eq.s32.totalorder %s35, 1
      %p108 = por %p106, %p107
      %p110 = scmp.ne.s32.totalorder %s93, %s109
      %p111 = scmp.eq.s32.totalorder %s35, 0
      %p112 = por %p110, %p111
      %s113 = sadd.s32 %s36, %s37
      %p114 = scmp.lt.s32.totalorder %s113, 0
      %s115 = scalar_select %p114, %s113, 0
      %s116 = sadd.s32 %s48, %s44
      %p117 = scmp.lt.s32.totalorder %s116, 0
      %s118 = scalar_select %p117, %s116, 0
      %s119 = ssub.s32 %s115, %s118
      %p120 = scmp.eq.s32.totalorder %s119, 0
      %s122 = sadd.s32 %s121, 1
      %s123 = scalar_select %p120, %s121, %s122
      %p126 = pneg %p120
      %p127 = scmp.eq.s32.totalorder %s29, 1
      %p128 = por %p126, %p127
      %p129 = scmp.ne.s32.totalorder %s121, %s124
      %p130 = scmp.eq.s32.totalorder %s29, 0
      %p131 = por %p129, %p130
      %p132 = scmp.ne.s32.totalorder %s121, %s124
      %p133 = scmp.eq.s32.totalorder %s34, 1
      %p134 = por %p132, %p133
      %p135 = scmp.ne.s32.totalorder %s124, %s125
      %p136 = scmp.eq.s32.totalorder %s34, 0
      %p137 = por %p135, %p136
      %p138 = scmp.ne.s32.totalorder %s124, %s125
      %p139 = scmp.eq.s32.totalorder %s35, 1
      %p140 = por %p138, %p139
      %p142 = scmp.ne.s32.totalorder %s125, %s141
      %p143 = scmp.eq.s32.totalorder %s35, 0
      %p144 = por %p142, %p143
      %s145 = ssub.s32 %s36, %s48
      %p146 = scmp.eq.s32.totalorder %s145, 0
      %s148 = sadd.s32 %s147, 1
      %s149 = scalar_select %p146, %s147, %s148
      %p152 = pneg %p146
      %p153 = scmp.eq.s32.totalorder %s29, 1
      %p154 = por %p152, %p153
      %p155 = scmp.ne.s32.totalorder %s147, %s150
      %p156 = scmp.eq.s32.totalorder %s29, 0
      %p157 = por %p155, %p156
      %p158 = scmp.ne.s32.totalorder %s147, %s150
      %p159 = scmp.eq.s32.totalorder %s34, 1
      %p160 = por %p158, %p159
      %p161 = scmp.ne.s32.totalorder %s150, %s151
      %p162 = scmp.eq.s32.totalorder %s34, 0
      %p163 = por %p161, %p162
      %p164 = scmp.ne.s32.totalorder %s150, %s151
      %p165 = scmp.eq.s32.totalorder %s35, 1
      %p166 = por %p164, %p165
      %p168 = scmp.ne.s32.totalorder %s151, %s167
      %p169 = scmp.eq.s32.totalorder %s35, 0
      %p170 = por %p168, %p169
      %s171 = ssub.s32 %s36, %s48
      %p172 = scmp.eq.s32.totalorder %s171, 0
      %s174 = sadd.s32 %s173, 1
      %s175 = scalar_select %p172, %s173, %s174
      %p178 = pneg %p172
      %p179 = scmp.eq.s32.totalorder %s29, 1
      %p180 = por %p178, %p179
      %p181 = scmp.ne.s32.totalorder %s173, %s176
      %p182 = scmp.eq.s32.totalorder %s29, 0
      %p183 = por %p181, %p182
      %p184 = scmp.ne.s32.totalorder %s173, %s176
      %p185 = scmp.eq.s32.totalorder %s34, 1
      %p186 = por %p184, %p185
      %p187 = scmp.ne.s32.totalorder %s176, %s177
      %p188 = scmp.eq.s32.totalorder %s34, 0
      %p189 = por %p187, %p188
      %p190 = scmp.ne.s32.totalorder %s176, %s177
      %p191 = scmp.eq.s32.totalorder %s35, 1
      %p192 = por %p190, %p191
      %p194 = scmp.ne.s32.totalorder %s177, %s193
      %p195 = scmp.eq.s32.totalorder %s35, 0
      %p196 = por %p194, %p195
      %s197 = ssub.s32 %s36, %s48
      %p198 = scmp.eq.s32.totalorder %s197, 0
      %s200 = sadd.s32 %s199, 1
      %s201 = scalar_select %p198, %s199, %s200
      %p204 = pneg %p198
      %p205 = scmp.eq.s32.totalorder %s29, 1
      %p206 = por %p204, %p205
      %p207 = scmp.ne.s32.totalorder %s199, %s202
      %p208 = scmp.eq.s32.totalorder %s29, 0
      %p209 = por %p207, %p208
      %p210 = scmp.ne.s32.totalorder %s199, %s202
      %p211 = scmp.eq.s32.totalorder %s34, 1
      %p212 = por %p210, %p211
      %p213 = scmp.ne.s32.totalorder %s202, %s203
      %p214 = scmp.eq.s32.totalorder %s34, 0
      %p215 = por %p213, %p214
      %p216 = scmp.ne.s32.totalorder %s202, %s203
      %p217 = scmp.eq.s32.totalorder %s35, 1
      %p218 = por %p216, %p217
      %p220 = scmp.ne.s32.totalorder %s203, %s219
      %p221 = scmp.eq.s32.totalorder %s35, 0
      %p222 = por %p220, %p221
      %s223 = ssub.s32 %s36, %s48
      %p224 = scmp.eq.s32.totalorder %s223, 0
      %s226 = sadd.s32 %s225, 1
      %s227 = scalar_select %p224, %s225, %s226
      %p230 = pneg %p224
      %p231 = scmp.eq.s32.totalorder %s29, 1
      %p232 = por %p230, %p231
      %p233 = scmp.ne.s32.totalorder %s225, %s228
      %p234 = scmp.eq.s32.totalorder %s29, 0
      %p235 = por %p233, %p234
      %p236 = scmp.ne.s32.totalorder %s225, %s228
      %p237 = scmp.eq.s32.totalorder %s34, 1
      %p238 = por %p236, %p237
      %p239 = scmp.ne.s32.totalorder %s228, %s229
      %p240 = scmp.eq.s32.totalorder %s34, 0
      %p241 = por %p239, %p240
      %p242 = scmp.ne.s32.totalorder %s228, %s229
      %p243 = scmp.eq.s32.totalorder %s35, 1
      %p244 = por %p242, %p243
      %p246 = scmp.ne.s32.totalorder %s229, %s245
      %p247 = scmp.eq.s32.totalorder %s35, 0
      %p248 = por %p246, %p247
      %s249 = ssub.s32 %s36, %s48
      %p250 = scmp.eq.s32.totalorder %s249, 0
      %s252 = sadd.s32 %s251, 1
      %s253 = scalar_select %p250, %s251, %s252
      %p256 = pneg %p250
      %p257 = scmp.eq.s32.totalorder %s29, 1
      %p258 = por %p256, %p257
      %p259 = scmp.ne.s32.totalorder %s251, %s254
      %p260 = scmp.eq.s32.totalorder %s29, 0
      %p261 = por %p259, %p260
      %p262 = scmp.ne.s32.totalorder %s251, %s254
      %p263 = scmp.eq.s32.totalorder %s34, 1
      %p264 = por %p262, %p263
      %p265 = scmp.ne.s32.totalorder %s254, %s255
      %p266 = scmp.eq.s32.totalorder %s34, 0
      %p267 = por %p265, %p266
      %p268 = scmp.ne.s32.totalorder %s254, %s255
      %p269 = scmp.eq.s32.totalorder %s35, 1
      %p270 = por %p268, %p269
      %p272 = scmp.ne.s32.totalorder %s255, %s271
      %p273 = scmp.eq.s32.totalorder %s35, 0
      %p274 = por %p272, %p273
      %p275 = scmp.le.s32.totalorder 1, %s29
      %p276 = scmp.lt.s32.totalorder %s29, 3
      %p277 = pnand %p275, %p276
      %p278 = pneg %p277
      // Predicated region
      $region9: #{tpu_custom_call.1} parent=5 // pred_check
        _
      $region10: #{tpu_custom_call.1} parent=5 // pred_check_branch
        %280 = sbr.rel (%p277) target = $region12
      $region11: #{tpu_custom_call.1} parent=5 // pred_region
        %s281 = ssub.s32 %s29, 1
      $region12: #{tpu_custom_call.1} parent=5 // pred_fallthru
        _
      %p282 = scmp.lt.s32.totalorder %s29, 2
      // Predicated region
      $region13: #{tpu_custom_call.1} parent=5 // pred_check
        %p283 = pneg %p282
      $region14: #{tpu_custom_call.1} parent=5 // pred_check_branch
        %285 = sbr.rel (%p283) target = $region16
      $region15: #{tpu_custom_call.1} parent=5 // pred_region
        // Predicated region
        $region17: #{tpu_custom_call.1} parent=15 // pred_check
          %p286 = pneg %p67
        $region18: #{tpu_custom_call.1} parent=15 // pred_check_branch
          %288 = sbr.rel (%p286) target = $region20
        $region19: #{tpu_custom_call.1} parent=15 // pred_region
          %s289 = sand.u32 %s57, 1
          %s290 = scalar_lea.sflag [#allocation3], %s289
          %s291 = sand.u32 %s57, 1
          %s292 = smul.addr %s291, 8
          %s293 = scalar_lea.vmem [#allocation2], %s292
          %s294 = sadd.s32 %s36, %s37
          %p295 = scmp.lt.s32.totalorder %s294, 0
          %s296 = scalar_select %p295, %s294, 0
          %s298 = ssub.s32 128, 128
          %299 = vsyncadd %s290, %s298
          %s300 = smul.addr %s296, 128
          %s301 = scalar_lea.hbm %s0, %s300
          %s303 = sshll.u32 %s293, 4
          %s304 = int_to_ptr.vmem [resolvable:$true] %s303
          %306 = dma.hbm_to_vmem [thread:$0]  %s301, 128, %s304, %s290
        $region20: #{tpu_custom_call.1} parent=15 // pred_fallthru
          _
        // Predicated region
        $region21: #{tpu_custom_call.1} parent=15 // pred_check
          %p307 = pneg %p99
        $region22: #{tpu_custom_call.1} parent=15 // pred_check_branch
          %309 = sbr.rel (%p307) target = $region24
        $region23: #{tpu_custom_call.1} parent=15 // pred_region
          %s310 = sand.u32 %s29, 1
          %s311 = scalar_lea.sflag [#allocation6], %s310
          %s312 = sand.u32 %s89, 1
          %s313 = smul.addr %s312, 8
          %s314 = scalar_lea.vmem [#allocation5], %s313
          %s315 = sadd.s32 %s36, %s37
          %p316 = scmp.lt.s32.totalorder %s315, 0
          %s317 = scalar_select %p316, %s315, 0
          %s319 = ssub.s32 128, 128
          %320 = vsyncadd %s311, %s319
          %s321 = smul.addr %s317, 128
          %s322 = scalar_lea.hbm %s1, %s321
          %s324 = sshll.u32 %s314, 4
          %s325 = int_to_ptr.vmem [resolvable:$true] %s324
          %327 = dma.hbm_to_vmem [thread:$0]  %s322, 128, %s325, %s311
        $region24: #{tpu_custom_call.1} parent=15 // pred_fallthru
          _
        // Predicated region
        $region25: #{tpu_custom_call.1} parent=15 // pred_check
          %p328 = pneg %p131
        $region26: #{tpu_custom_call.1} parent=15 // pred_check_branch
          %330 = sbr.rel (%p328) target = $region28
        $region27: #{tpu_custom_call.1} parent=15 // pred_region
          %s331 = sand.u32 %s29, 1
          %s332 = scalar_lea.sflag [#allocation6], %s331
          %s333 = sand.u32 %s121, 1
          %s334 = smul.addr %s333, 8
          %s335 = scalar_lea.vmem [#allocation7], %s334
          %s336 = sadd.s32 %s36, %s37
          %p337 = scmp.lt.s32.totalorder %s336, 0
          %s338 = scalar_select %p337, %s336, 0
          %s340 = ssub.s32 128, 128
          %341 = vsyncadd %s332, %s340
          %s342 = smul.addr %s338, 128
          %s343 = scalar_lea.hbm %s2, %s342
          %s345 = sshll.u32 %s335, 4
          %s346 = int_to_ptr.vmem [resolvable:$true] %s345
          %348 = dma.hbm_to_vmem [thread:$0]  %s343, 128, %s346, %s332
        $region28: #{tpu_custom_call.1} parent=15 // pred_fallthru
          _
      $region16: #{tpu_custom_call.1} parent=5 // pred_fallthru
        _
      %p349 = scmp.le.s32.totalorder 1, %s29
      %p350 = scmp.lt.s32.totalorder %s29, 3
      %p351 = pnand %p349, %p350
      %p352 = pneg %p351
      // Predicated region
      $region29: #{tpu_custom_call.1} parent=5 // pred_check
        _
      $region30: #{tpu_custom_call.1} parent=5 // pred_check_branch
        %354 = sbr.rel (%p351) target = $region32
      $region31: #{tpu_custom_call.1} parent=5 // pred_region
        %s355 = ssub.s32 %s29, 1
        %s356 = sand.u32 %s60, 1
        %s357 = scalar_lea.sflag [#allocation3], %s356
        %s358 = sand.u32 %s60, 1
        %s359 = smul.addr %s358, 8
        %s360 = scalar_lea.vmem [#allocation2], %s359
        // Predicated region
        $region33: #{tpu_custom_call.1} parent=31 // pred_check
          %p361 = pneg %p73
        $region34: #{tpu_custom_call.1} parent=31 // pred_check_branch
          %363 = sbr.rel (%p361) target = $region36
        $region35: #{tpu_custom_call.1} parent=31 // pred_region
          %364 = dma.done %s357, 128
        $region36: #{tpu_custom_call.1} parent=31 // pred_fallthru
          _
        %s365 = sand.u32 %s34, 1
        %s366 = scalar_lea.sflag [#allocation6], %s365
        %s367 = sand.u32 %s92, 1
        %s368 = smul.addr %s367, 8
        %s369 = scalar_lea.vmem [#allocation5], %s368
        // Predicated region
        $region37: #{tpu_custom_call.1} parent=31 // pred_check
          %p370 = pneg %p105
        $region38: #{tpu_custom_call.1} parent=31 // pred_check_branch
          %372 = sbr.rel (%p370) target = $region40
        $region39: #{tpu_custom_call.1} parent=31 // pred_region
          %373 = dma.done %s366, 128
        $region40: #{tpu_custom_call.1} parent=31 // pred_fallthru
          _
        %s374 = sand.u32 %s34, 1
        %s375 = scalar_lea.sflag [#allocation6], %s374
        %s376 = sand.u32 %s124, 1
        %s377 = smul.addr %s376, 8
        %s378 = scalar_lea.vmem [#allocation7], %s377
        // Predicated region
        $region41: #{tpu_custom_call.1} parent=31 // pred_check
          %p379 = pneg %p137
        $region42: #{tpu_custom_call.1} parent=31 // pred_check_branch
          %381 = sbr.rel (%p379) target = $region44
        $region43: #{tpu_custom_call.1} parent=31 // pred_region
          %382 = dma.done %s375, 128
        $region44: #{tpu_custom_call.1} parent=31 // pred_fallthru
          _
        %s383 = sand.u32 %s60, 1
        %s384 = scalar_lea.sflag [#allocation3], %s383
        %s385 = sand.u32 %s60, 1
        %s386 = smul.addr %s385, 8
        %s387 = scalar_lea.vmem [#allocation2], %s386
        %p388 = pneg %p73
        %p389 = pneg %p70
        %s390 = sand.u32 %s34, 1
        %s391 = scalar_lea.sflag [#allocation6], %s390
        %s392 = sand.u32 %s92, 1
        %s393 = smul.addr %s392, 8
        %s394 = scalar_lea.vmem [#allocation5], %s393
        %p395 = pneg %p105
        %p396 = pneg %p102
        %s397 = sand.u32 %s34, 1
        %s398 = scalar_lea.sflag [#allocation6], %s397
        %s399 = sand.u32 %s124, 1
        %s400 = smul.addr %s399, 8
        %s401 = scalar_lea.vmem [#allocation7], %s400
        %p402 = pneg %p137
        %p403 = pneg %p134
        %p404 = pneg %p163
        %p405 = pneg %p160
        %s406 = sand.u32 %s150, 1
        %s407 = scalar_lea.sflag [#allocation4], %s406
        %s408 = sand.u32 %s150, 1
        %s409 = smul.addr %s408, 8
        %s410 = scalar_lea.vmem [#allocation8], %s409
        %p411 = pneg %p189
        %p412 = pneg %p186
        %s413 = sand.u32 %s34, 1
        %s414 = scalar_lea.sflag [#allocation10], %s413
        %s415 = sand.u32 %s176, 1
        %s416 = smul.addr %s415, 8
        %s417 = scalar_lea.vmem [#allocation9], %s416
        %p418 = pneg %p215
        %p419 = pneg %p212
        %s420 = sand.u32 %s34, 1
        %s421 = scalar_lea.sflag [#allocation10], %s420
        %s422 = sand.u32 %s202, 1
        %s423 = smul.addr %s422, 8
        %s424 = scalar_lea.vmem [#allocation11], %s423
        %p425 = pneg %p241
        %p426 = pneg %p238
        %s427 = sand.u32 %s34, 1
        %s428 = scalar_lea.sflag [#allocation13], %s427
        %s429 = sand.u32 %s228, 1
        %s430 = smul.addr %s429, 8
        %s431 = scalar_lea.vmem [#allocation12], %s430
        %p432 = pneg %p267
        %p433 = pneg %p264
        %s434 = sand.u32 %s34, 1
        %s435 = scalar_lea.sflag [#allocation13], %s434
        %s436 = sand.u32 %s254, 1
        %s437 = smul.addr %s436, 8
        %s438 = scalar_lea.vmem [#allocation14], %s437
        %s439 = sadd.s32 %s38, %s39
        %p440 = scmp.lt.s32.totalorder %s439, 0
        %s441 = scalar_select %p440, %s439, 0
        %s442 = sadd.s32 %s38, %s39
        %p443 = scmp.lt.s32.totalorder %s442, 0
        %s444 = scalar_select %p443, %s442, 0
        %s445 = sadd.s32 %s38, %s39
        %p446 = scmp.lt.s32.totalorder %s445, 0
        %s447 = scalar_select %p446, %s445, 0
        %p448 = scmp.eq.s32.totalorder %s39, 0
        // Predicated region
        $region45: #{tpu_custom_call.1} parent=31 // pred_check
          %p449 = pneg %p448
        $region46: #{tpu_custom_call.1} parent=31 // pred_check_branch
          %451 = sbr.rel (%p449) target = $region48
        $region47: #{tpu_custom_call.1} parent=31 // pred_region
          %452 = vst [vmem:[%s410] sm:$0xff] 0.0
          %453 = vst [vmem:[%s417] sm:$0xff] 0.0
          %454 = vst [vmem:[%s424] sm:$0xff] 0.0
          %455 = vst [vmem:[%s431] sm:$0xff] 0.0
          %456 = vst [vmem:[%s438] sm:$0xff] 0.0
        $region48: #{tpu_custom_call.1} parent=31 // pred_fallthru
          _
        %v457 = vld [vmem:[%s360] sm:$0xff]
        %v458 = vld [vmem:[%s369] sm:$0xff]
        %v459 = vld [vmem:[%s378] sm:$0xff]
        %s460 = sadd.s32 %s38, %s39
        %s461 = smul.u32 %s460, 8
        %v462 = vlaneseq
        %v463 = vshrl.u32 %v462, 7
        %v464 = vstv %s461
        %v465 = vadd.s32 %v464, %v463
        %vm466 = vcmp.lt.s32.totalorder %v465, 8
        %vm467 = vcmp.ne.f32.partialorder %v459, 0.0
        %vm468 = vmand %vm467, %vm466
        %vm469 = vcmp.ge.f32.partialorder %v458, 0.5
        %vm470 = vmand %vm468, %vm469
        %vm471 = vcmp.lt.f32.partialorder %v458, 0.5
        %vm472 = vmand %vm468, %vm471
        %v473 = vmax.f32 %v457, 0.0
        %v474 = vmul.f32 %v457, %v458
        %v475 = vsub.f32 %v473, %v474
        %v476 = vand.u32 2147483647, %v457
        %v477 = vsub.f32 0.0, %v476
        %v478 = vmul.f32 %v477, 1.442695
        %v479 = vpow.pop %v478
        %v480 = vadd.f32 %v479, 1.0
        %v481 = vlog2.pop %v480
        %v482 = vmul.f32 %v481, 0.6931472
        %v483 = vmul.f32 -0.5, %v479
        %v484 = vadd.f32 %v483, 1.0
        %v485 = vmul.f32 %v484, %v479
        %v486 = vand.u32 2147483647, %v479
        %vm487 = vcmp.lt.f32.partialorder %v486, 0.0004427343
        %v488 = vsel %vm487, %v485, %v482
        %v489 = vadd.f32 %v475, %v488
        %v490 = vld [vmem:[%s410] sm:$0xff]
        %v491 = vsel %vm472, 1, 0
        %v492 = vcvt.s32.f32 %v491
        %v493 = vadd.f32 %v492, 0.0
        %v494 = vadd.f32 %v490, %v493
        %495 = vst [vmem:[%s410] sm:$0xff] %v494
        %v496 = vld [vmem:[%s417] sm:$0xff]
        %v497 = vsel %vm470, 1, 0
        %v498 = vcvt.s32.f32 %v497
        %v499 = vadd.f32 %v498, 0.0
        %v500 = vadd.f32 %v496, %v499
        %501 = vst [vmem:[%s417] sm:$0xff] %v500
        %v502 = vld [vmem:[%s424] sm:$0xff]
        %v503 = vsel %vm466, %v459, 0.0
        %v504 = vadd.f32 %v503, 0.0
        %v505 = vadd.f32 %v502, %v504
        %506 = vst [vmem:[%s424] sm:$0xff] %v505
        %v507 = vld [vmem:[%s431] sm:$0xff]
        %v508 = vsel %vm472, %v489, 0.0
        %v509 = vadd.f32 %v508, 0.0
        %v510 = vadd.f32 %v507, %v509
        %511 = vst [vmem:[%s431] sm:$0xff] %v510
        %v512 = vld [vmem:[%s438] sm:$0xff]
        %v513 = vsel %vm470, %v489, 0.0
        %v514 = vadd.f32 %v513, 0.0
        %v515 = vadd.f32 %v512, %v514
        %516 = vst [vmem:[%s438] sm:$0xff] %v515
        %s517 = sand.u32 %s150, 1
        %s518 = scalar_lea.sflag [#allocation4], %s517
        %s519 = sand.u32 %s150, 1
        %s520 = smul.addr %s519, 8
        %s521 = scalar_lea.vmem [#allocation8], %s520
        %s522 = sand.u32 %s34, 1
        %s523 = scalar_lea.sflag [#allocation10], %s522
        %s524 = sand.u32 %s176, 1
        %s525 = smul.addr %s524, 8
        %s526 = scalar_lea.vmem [#allocation9], %s525
        %s527 = sand.u32 %s34, 1
        %s528 = scalar_lea.sflag [#allocation10], %s527
        %s529 = sand.u32 %s202, 1
        %s530 = smul.addr %s529, 8
        %s531 = scalar_lea.vmem [#allocation11], %s530
        %s532 = sand.u32 %s34, 1
        %s533 = scalar_lea.sflag [#allocation13], %s532
        %s534 = sand.u32 %s228, 1
        %s535 = smul.addr %s534, 8
        %s536 = scalar_lea.vmem [#allocation12], %s535
        %s537 = sand.u32 %s34, 1
        %s538 = scalar_lea.sflag [#allocation13], %s537
        %s539 = sand.u32 %s254, 1
        %s540 = smul.addr %s539, 8
        %s541 = scalar_lea.vmem [#allocation14], %s540
        // Predicated region
        $region49: #{tpu_custom_call.1} parent=31 // pred_check
          %p542 = pneg %p160
        $region50: #{tpu_custom_call.1} parent=31 // pred_check_branch
          %544 = sbr.rel (%p542) target = $region52
        $region51: #{tpu_custom_call.1} parent=31 // pred_region
          %s546 = ssub.s32 128, 128
          %547 = vsyncadd %s518, %s546
          %s548 = smul.addr %s38, 128
          %s549 = scalar_lea.hbm %s3, %s548
          %s551 = sshll.u32 %s521, 4
          %s552 = int_to_ptr.vmem [resolvable:$true] %s551
          %554 = dma.vmem_to_hbm [thread:$0]  %s552, 128, %s549, %s518
        $region52: #{tpu_custom_call.1} parent=31 // pred_fallthru
          _
        // Predicated region
        $region53: #{tpu_custom_call.1} parent=31 // pred_check
          %p555 = pneg %p186
        $region54: #{tpu_custom_call.1} parent=31 // pred_check_branch
          %557 = sbr.rel (%p555) target = $region56
        $region55: #{tpu_custom_call.1} parent=31 // pred_region
          %s559 = ssub.s32 128, 128
          %560 = vsyncadd %s523, %s559
          %s561 = smul.addr %s38, 128
          %s562 = scalar_lea.hbm %s4, %s561
          %s564 = sshll.u32 %s526, 4
          %s565 = int_to_ptr.vmem [resolvable:$true] %s564
          %567 = dma.vmem_to_hbm [thread:$0]  %s565, 128, %s562, %s523
        $region56: #{tpu_custom_call.1} parent=31 // pred_fallthru
          _
        // Predicated region
        $region57: #{tpu_custom_call.1} parent=31 // pred_check
          %p568 = pneg %p212
        $region58: #{tpu_custom_call.1} parent=31 // pred_check_branch
          %570 = sbr.rel (%p568) target = $region60
        $region59: #{tpu_custom_call.1} parent=31 // pred_region
          %s572 = ssub.s32 128, 128
          %573 = vsyncadd %s528, %s572
          %s574 = smul.addr %s38, 128
          %s575 = scalar_lea.hbm %s5, %s574
          %s577 = sshll.u32 %s531, 4
          %s578 = int_to_ptr.vmem [resolvable:$true] %s577
          %580 = dma.vmem_to_hbm [thread:$0]  %s578, 128, %s575, %s528
        $region60: #{tpu_custom_call.1} parent=31 // pred_fallthru
          _
        // Predicated region
        $region61: #{tpu_custom_call.1} parent=31 // pred_check
          %p581 = pneg %p238
        $region62: #{tpu_custom_call.1} parent=31 // pred_check_branch
          %583 = sbr.rel (%p581) target = $region64
        $region63: #{tpu_custom_call.1} parent=31 // pred_region
          %s585 = ssub.s32 128, 128
          %586 = vsyncadd %s533, %s585
          %s587 = smul.addr %s38, 128
          %s588 = scalar_lea.hbm %s6, %s587
          %s590 = sshll.u32 %s536, 4
          %s591 = int_to_ptr.vmem [resolvable:$true] %s590
          %593 = dma.vmem_to_hbm [thread:$0]  %s591, 128, %s588, %s533
        $region64: #{tpu_custom_call.1} parent=31 // pred_fallthru
          _
        // Predicated region
        $region65: #{tpu_custom_call.1} parent=31 // pred_check
          %p594 = pneg %p264
        $region66: #{tpu_custom_call.1} parent=31 // pred_check_branch
          %596 = sbr.rel (%p594) target = $region68
        $region67: #{tpu_custom_call.1} parent=31 // pred_region
          %s598 = ssub.s32 128, 128
          %599 = vsyncadd %s538, %s598
          %s600 = smul.addr %s38, 128
          %s601 = scalar_lea.hbm %s7, %s600
          %s603 = sshll.u32 %s541, 4
          %s604 = int_to_ptr.vmem [resolvable:$true] %s603
          %606 = dma.vmem_to_hbm [thread:$0]  %s604, 128, %s601, %s538
        $region68: #{tpu_custom_call.1} parent=31 // pred_fallthru
          _
      $region32: #{tpu_custom_call.1} parent=5 // pred_fallthru
        _
      %p607 = scmp.le.s32.totalorder 2, %s29
      // Predicated region
      $region69: #{tpu_custom_call.1} parent=5 // pred_check
        %p608 = pneg %p607
      $region70: #{tpu_custom_call.1} parent=5 // pred_check_branch
        %610 = sbr.rel (%p608) target = $region72
      $region71: #{tpu_custom_call.1} parent=5 // pred_region
        %s611 = ssub.s32 %s29, 2
        // Predicated region
        $region73: #{tpu_custom_call.1} parent=71 // pred_check
          %p612 = pneg %p166
        $region74: #{tpu_custom_call.1} parent=71 // pred_check_branch
          %614 = sbr.rel (%p612) target = $region76
        $region75: #{tpu_custom_call.1} parent=71 // pred_region
          %s615 = sand.u32 %s151, 1
          %s616 = scalar_lea.sflag [#allocation4], %s615
          %s617 = sand.u32 %s151, 1
          %s618 = smul.addr %s617, 8
          %s619 = scalar_lea.vmem [#allocation8], %s618
          %620 = dma.done %s616, 128
        $region76: #{tpu_custom_call.1} parent=71 // pred_fallthru
          _
        // Predicated region
        $region77: #{tpu_custom_call.1} parent=71 // pred_check
          %p621 = pneg %p192
        $region78: #{tpu_custom_call.1} parent=71 // pred_check_branch
          %623 = sbr.rel (%p621) target = $region80
        $region79: #{tpu_custom_call.1} parent=71 // pred_region
          %s624 = sand.u32 %s35, 1
          %s625 = scalar_lea.sflag [#allocation10], %s624
          %s626 = sand.u32 %s177, 1
          %s627 = smul.addr %s626, 8
          %s628 = scalar_lea.vmem [#allocation9], %s627
          %629 = dma.done %s625, 128
        $region80: #{tpu_custom_call.1} parent=71 // pred_fallthru
          _
        // Predicated region
        $region81: #{tpu_custom_call.1} parent=71 // pred_check
          %p630 = pneg %p218
        $region82: #{tpu_custom_call.1} parent=71 // pred_check_branch
          %632 = sbr.rel (%p630) target = $region84
        $region83: #{tpu_custom_call.1} parent=71 // pred_region
          %s633 = sand.u32 %s35, 1
          %s634 = scalar_lea.sflag [#allocation10], %s633
          %s635 = sand.u32 %s203, 1
          %s636 = smul.addr %s635, 8
          %s637 = scalar_lea.vmem [#allocation11], %s636
          %638 = dma.done %s634, 128
        $region84: #{tpu_custom_call.1} parent=71 // pred_fallthru
          _
        // Predicated region
        $region85: #{tpu_custom_call.1} parent=71 // pred_check
          %p639 = pneg %p244
        $region86: #{tpu_custom_call.1} parent=71 // pred_check_branch
          %641 = sbr.rel (%p639) target = $region88
        $region87: #{tpu_custom_call.1} parent=71 // pred_region
          %s642 = sand.u32 %s35, 1
          %s643 = scalar_lea.sflag [#allocation13], %s642
          %s644 = sand.u32 %s229, 1
          %s645 = smul.addr %s644, 8
          %s646 = scalar_lea.vmem [#allocation12], %s645
          %647 = dma.done %s643, 128
        $region88: #{tpu_custom_call.1} parent=71 // pred_fallthru
          _
        // Predicated region
        $region89: #{tpu_custom_call.1} parent=71 // pred_check
          %p648 = pneg %p270
        $region90: #{tpu_custom_call.1} parent=71 // pred_check_branch
          %650 = sbr.rel (%p648) target = $region92
        $region91: #{tpu_custom_call.1} parent=71 // pred_region
          %s651 = sand.u32 %s35, 1
          %s652 = scalar_lea.sflag [#allocation13], %s651
          %s653 = sand.u32 %s255, 1
          %s654 = smul.addr %s653, 8
          %s655 = scalar_lea.vmem [#allocation14], %s654
          %656 = dma.done %s652, 128
        $region92: #{tpu_custom_call.1} parent=71 // pred_fallthru
          _
      $region72: #{tpu_custom_call.1} parent=5 // pred_fallthru
        _
    $region6: #{tpu_custom_call.1} parent=1 // loop_footer
      %s33 = sadd.s32 1, %s29
    $region7: #{tpu_custom_call.1} parent=1 // loop_footer_branch
      %28 = sbr.rel target = $region3
    $region8: #{tpu_custom_call.1} parent=1 // loop_exit
      _
    %657 = vsyncpa [#allocation3], 1
    %s658 = scalar_lea.sflag [#allocation3], 1
    %659 = vsyncpa %s658, 1
    %660 = vsyncpa [#allocation6], 1
    %s661 = scalar_lea.sflag [#allocation6], 1
    %662 = vsyncpa %s661, 1
    %663 = vsyncpa [#allocation4], 1
    %s664 = scalar_lea.sflag [#allocation4], 1
    %665 = vsyncpa %s664, 1
    %666 = vsyncpa [#allocation10], 1
    %s667 = scalar_lea.sflag [#allocation10], 1
    %668 = vsyncpa %s667, 1
    %669 = vsyncpa [#allocation13], 1
    %s670 = scalar_lea.sflag [#allocation13], 1
    %671 = vsyncpa %s670, 1

</llo_original>
